<compile_context>
chip_gen: v6e
topology: v6e:2x2x1
jax: 0.10.0
libtpu: 0.0.40
codegen_flags: <defaults>
</compile_context>

<pallas_src>
import functools

import jax
import jax.numpy as jnp
from jax.experimental import pallas as pl
from jax.experimental.pallas import tpu as pltpu


_LANE = 128
_VMEM_BUDGET = 28 * 1024 * 1024       # working-set target: safe on v5e/v6e/v7x
_VMEM_LIMIT_CAP = 48 * 1024 * 1024    # < v7x 64 MiB physical VMEM


def _round_up(x: int, m: int) -> int:
    return ((x + m - 1) // m) * m


def _sublane(dtype) -> int:
    """Sublane multiple for a dtype: 8 (f32), 16 (bf16), 32 (int8/fp8)."""
    return max(8, 32 // jnp.dtype(dtype).itemsize)


def _largest_divisor_tile(padded: int, granule: int, cap: int) -> int:
    """Largest multiple of `granule` that divides `padded` and is <= cap."""
    q = padded // granule
    max_d = max(1, cap // granule)
    best = 1
    for d in range(1, max_d + 1):
        if q % d == 0:
            best = d
    return best * granule


def _pick_tile_and_pad(dim: int, cap: int):
    """(tile, padded_dim) for a lane-axis dimension.

    Prefer a 256 granule (full v6e/v7x MXU width) when it costs no extra
    zero-padding, else 128 (v5e native granule, no wasted compute).
    """
    if cap >= 256 and _round_up(dim, 256) == _round_up(dim, 128):
        g = 256
    else:
        g = _LANE
    padded = _round_up(dim, g)
    return _largest_divisor_tile(padded, g, cap), padded


def _apply_activation(y, activation):
    if activation is None:
        return y
    if activation == "relu":
        return jnp.maximum(y, 0.0)
    if activation == "tanh":
        return jnp.tanh(y)
    raise ValueError(f"unsupported activation: {activation!r}")


def _slimfc_kernel(x_ref, w_ref, b_ref, o_ref, *scratch, activation, k_steps):
    """One (tm, tn) output tile of act(x @ W_t + b), reduced over the K axis.

    x_ref:   (tm, tk)  activations
    w_ref:   (tk, tn)  weight pre-transposed to [in, out] (lane-dense out)
    b_ref:   (1,  tn)  bias (f32)
    o_ref:   (tm, tn)  output tile
    scratch: optional (tm, tn) f32 accumulator — only for low-precision outputs
    """
    if k_steps == 1:
        # Fast path: whole reduction in one MXU call, bias fused, no scratch,
        # no init/finalize control flow.
        y = jnp.dot(x_ref[...], w_ref[...], preferred_element_type=jnp.float32)
        o_ref[...] = _apply_activation(y + b_ref[...], activation).astype(o_ref.dtype)
        return

    # Multi-step reduction. For f32 outputs accumulate directly into the
    # VMEM-resident output block (its block index ignores k); otherwise use
    # the f32 scratch and cast once at the end.
    acc_ref = scratch[0] if scratch else o_ref
    k = pl.program_id(2)

    @pl.when(k == 0)
    def _():
        # Bias fused into the accumulator init (no epilogue VPU add pass).
        acc_ref[...] = jnp.broadcast_to(b_ref[...], acc_ref.shape).astype(acc_ref.dtype)

    acc_ref[...] += jnp.dot(x_ref[...], w_ref[...],
                            preferred_element_type=jnp.float32)

    if scratch or activation is not None:
        @pl.when(k == k_steps - 1)
        def _():
            o_ref[...] = _apply_activation(acc_ref[...], activation).astype(o_ref.dtype)


def _slimfc_apply(x, w_t, bias2d, *, in_size, out_size, Kp, Np, tn, tk,
                  activation, compute_dtype, tm_cap, auto_collapse_k):
    B, in_sz = x.shape
    assert in_sz == in_size, (in_sz, in_size)

    out_dtype = jnp.dtype(x.dtype)
    cdtype = jnp.dtype(compute_dtype) if compute_dtype is not None else out_dtype
    in_bytes = cdtype.itemsize
    out_bytes = out_dtype.itemsize
    needs_f32_scratch = out_dtype != jnp.dtype(jnp.float32)

    # Batch tile: dtype-correct sublane multiple (8 f32 / 16 bf16 / 32 int8).
    sub = max(_sublane(cdtype), _sublane(out_dtype))
    Bp = _round_up(B, sub)
    tm = _largest_divisor_tile(Bp, sub, tm_cap)

    # Cast (optional bf16 MXU path) and zero-pad x to the padded tile grid.
    xk = x if x.dtype == cdtype else x.astype(cdtype)
    if (Bp, Kp) != (B, in_size):
        xk = jnp.pad(xk, ((0, Bp - B), (0, Kp - in_size)))

    gi = Bp // tm
    tn_eff = tn
    # Megacore: if only one parallel block but non-trivial work, split the out
    # axis so both v7x TensorCores get a block (keep tn a multiple of 128).
    if (gi * (Np // tn_eff) == 1 and tn_eff % 256 == 0
            and 2 * Bp * Kp * Np >= (1 << 24)):
        tn_eff //= 2
    gj = Np // tn_eff

    def footprint(tm_, tn_, tk_, w_bufs=2):
        f = (2 * tm_ * tk_ * in_bytes            # x, double-buffered
             + w_bufs * tk_ * tn_ * in_bytes     # W^T
             + 2 * tm_ * tn_ * out_bytes         # out
             + 2 * tn_ * 4)                      # bias
        if needs_f32_scratch:
            f += tm_ * tn_ * 4
        return f

    # Small-problem fast path: collapse the K grid axis when the whole
    # reduction fits the VMEM budget (x fetched once, no init/finalize).
    tk_eff = tk
    if auto_collapse_k and tk_eff < Kp and footprint(tm, tn_eff, Kp) <= _VMEM_BUDGET:
        tk_eff = Kp
    k_steps = Kp // tk_eff

    # When K is collapsed and many weight tiles stream past, deepen the weight
    # pipeline to hide HBM latency behind the tiny per-tile compute.
    deep_w = (k_steps == 1 and gj >= 3
              and footprint(tm, tn_eff, tk_eff, w_bufs=3) <= _VMEM_BUDGET)

    use_scratch = needs_f32_scratch and k_steps > 1

    fp = footprint(tm, tn_eff, tk_eff, w_bufs=3 if deep_w else 2)
    vmem_limit = int(min(max(fp * 3 // 2 + (4 << 20), 32 << 20), _VMEM_LIMIT_CAP))

    w_spec_kwargs = {"pipeline_mode": pl.Buffered(3)} if deep_w else {}
    in_specs = [
        pl.BlockSpec((tm, tk_eff), lambda i, j, k: (i, k)),        # x
        pl.BlockSpec((tk_eff, tn_eff), lambda i, j, k: (k, j),     # W^T [in,out]
                     **w_spec_kwargs),
        pl.BlockSpec((1, tn_eff), lambda i, j, k: (0, j)),         # bias
    ]
    out_spec = pl.BlockSpec((tm, tn_eff), lambda i, j, k: (i, j))
    scratch_shapes = [pltpu.VMEM((tm, tn_eff), jnp.float32)] if use_scratch else []

    kernel = functools.partial(_slimfc_kernel, activation=activation,
                               k_steps=k_steps)

    cost = pl.CostEstimate(
        flops=2 * Bp * Kp * Np,
        transcendentals=(Bp * Np if activation == "tanh" else 0),
        bytes_accessed=(Bp * Kp * in_bytes + gi * Kp * Np * in_bytes
                        + Bp * Np * out_bytes + Np * 4),
    )

    out = pl.pallas_call(
        kernel,
        out_shape=jax.ShapeDtypeStruct((Bp, Np), out_dtype),
        grid_spec=pltpu.PrefetchScalarGridSpec(
            num_scalar_prefetch=0,
            grid=(gi, gj, k_steps),
            in_specs=in_specs,
            out_specs=out_spec,
            scratch_shapes=scratch_shapes,
        ),
        compiler_params=pltpu.CompilerParams(
            dimension_semantics=("parallel", "parallel", "arbitrary"),
            vmem_limit_bytes=vmem_limit,
        ),
        cost_estimate=cost,
    )(xk, w_t, bias2d)

    return out[:B, :out_size]


class SlimFC:
    """Pallas-TPU equivalent of torch SlimFC: y = act(x @ W^T + b).

    The weight is transposed to [in, out] (lane-dense out axis), zero-padded
    to the tile grid and optionally cast to `compute_dtype` ONCE here, so the
    per-call hot path touches only x and the kernel.
    """

    def __init__(self, weight, bias, activation=None, *, compute_dtype=None,
                 tm=512, tn=512, tk=1024, auto_collapse_k=True):
        out_size, in_size = weight.shape
        assert bias.shape == (out_size,)
        self.in_size = int(in_size)
        self.out_size = int(out_size)
        self.activation = activation
        self.compute_dtype = None if compute_dtype is None else jnp.dtype(compute_dtype)
        self._tm_cap = tm
        self._auto_collapse_k = auto_collapse_k

        # N / K tiling is batch-independent: decide once, pad the weight once.
        self.tn, self.Np = _pick_tile_and_pad(self.out_size, tn)
        self.tk, self.Kp = _pick_tile_and_pad(self.in_size, tk)

        w_t = weight.T                                    # [in, out]
        if self.compute_dtype is not None and w_t.dtype != self.compute_dtype:
            w_t = w_t.astype(self.compute_dtype)
        if (self.Kp, self.Np) != (self.in_size, self.out_size):
            w_t = jnp.pad(w_t, ((0, self.Kp - self.in_size),
                                (0, self.Np - self.out_size)))
        self.w_t = w_t

        b2 = bias.astype(jnp.float32).reshape(1, self.out_size)
        if self.Np != self.out_size:
            b2 = jnp.pad(b2, ((0, 0), (0, self.Np - self.out_size)))
        self.bias2d = b2

    def __call__(self, x):
        return _slimfc_apply(
            x, self.w_t, self.bias2d,
            in_size=self.in_size, out_size=self.out_size,
            Kp=self.Kp, Np=self.Np, tn=self.tn, tk=self.tk,
            activation=self.activation, compute_dtype=self.compute_dtype,
            tm_cap=self._tm_cap, auto_collapse_k=self._auto_collapse_k)


def slim_fc(x, weight, bias, activation=None, **kwargs):
    """One-shot functional wrapper (re-prepares the weight every call).
    Prefer constructing a SlimFC once for repeated forwards."""
    return SlimFC(weight, bias, activation, **kwargs)(x)


if __name__ == "__main__":
    key = jax.random.PRNGKey(0)

    def make_params(k, in_size, out_size):
        # nn.Linear default weight init: U(-1/sqrt(in), 1/sqrt(in)); bias_init = 0.
        bound = 1.0 / float(in_size) ** 0.5
        w = jax.random.uniform(k, (out_size, in_size), dtype=jnp.float32,
                               minval=-bound, maxval=bound)
        b = jnp.zeros((out_size,), dtype=jnp.float32)
        return w, b

    def ref(x, w, b, activation):
        y = (x.astype(jnp.float32) @ w.astype(jnp.float32).T
             + b.astype(jnp.float32)[None, :])
        if activation == "relu":
            y = jnp.maximum(y, 0.0)
        elif activation == "tanh":
            y = jnp.tanh(y)
        return y

    keys = jax.random.split(key, 8)

    # Case 1: tiny SlimFC(32 -> 64, ReLU), batch=8, f32 — exercises the
    # zero-padding path and the collapsed-K single-block fast path.
    w1, b1 = make_params(keys[0], 32, 64)
    x1 = jax.random.normal(keys[1], (8, 32), dtype=jnp.float32)
    out1 = jax.block_until_ready(slim_fc(x1, w1, b1, activation="relu"))
    assert out1.shape == (8, 64)
    assert jnp.allclose(out1, ref(x1, w1, b1, "relu"), atol=1e-5, rtol=1e-5)

    # Case 2: SlimFC(512 -> 256, Tanh), batch=64, f32, cached-weight class —
    # collapsed-K fast path + megacore out-axis split.
    w2, b2 = make_params(keys[2], 512, 256)
    fc2 = SlimFC(w2, b2, activation="tanh")
    x2 = jax.random.normal(keys[3], (64, 512), dtype=jnp.float32)
    out2 = jax.block_until_ready(fc2(x2))
    assert out2.shape == (64, 256)
    assert jnp.allclose(out2, ref(x2, w2, b2, "tanh"), atol=2e-4, rtol=2e-4)

    # Case 3: multi-step K reduction with f32 output accumulated directly in
    # the VMEM-resident output block (no scratch): SlimFC(512 -> 128, ReLU).
    w3, b3 = make_params(keys[4], 512, 128)
    fc3 = SlimFC(w3, b3, activation="relu", tk=128, auto_collapse_k=False)
    x3 = jax.random.normal(keys[5], (16, 512), dtype=jnp.float32)
    out3 = jax.block_until_ready(fc3(x3))
    assert out3.shape == (16, 128)
    assert jnp.allclose(out3, ref(x3, w3, b3, "relu"), atol=2e-4, rtol=2e-4)

    # Case 4: bf16 MXU path, bf16 activations/output, multi-step K reduction
    # through the f32 scratch accumulator: SlimFC(1024 -> 128, Tanh).
    w4, b4 = make_params(keys[6], 1024, 128)
    fc4 = SlimFC(w4, b4, activation="tanh", compute_dtype=jnp.bfloat16,
                 tk=256, auto_collapse_k=False)
    x4 = jax.random.normal(keys[7], (32, 1024), dtype=jnp.float32).astype(jnp.bfloat16)
    out4 = jax.block_until_ready(fc4(x4))
    assert out4.shape == (32, 128)
    assert out4.dtype == jnp.bfloat16
    ref4 = ref(x4, w4.astype(jnp.bfloat16), b4, "tanh")
    assert jnp.allclose(out4.astype(jnp.float32), ref4, atol=3e-2, rtol=3e-2)

    print("KERNEL_OK")
</pallas_src>

<mosaic_0001>
module attributes {stable_mosaic.version = 11 : i64} {
  func.func @_slimfc_kernel(%arg0: i32, %arg1: i32, %arg2: i32, %arg3: memref<8x128xf32, #tpu.memory_space<vmem>>, %arg4: memref<128x128xf32, #tpu.memory_space<vmem>>, %arg5: memref<1x128xf32, #tpu.memory_space<vmem>>, %arg6: memref<8x128xf32, #tpu.memory_space<vmem>>) attributes {dimension_semantics = [#tpu.dimension_semantics<parallel>, #tpu.dimension_semantics<parallel>, #tpu.dimension_semantics<arbitrary>], iteration_bounds = array<i64: 1, 1, 1>, scalar_prefetch = 0 : i64, scratch_operands = 0 : i64, tpu.core_type = #tpu.core_type<tc>, window_params = [{transform_indices = @transform_0, window_bounds = array<i64: 8, 128>}, {transform_indices = @transform_1, window_bounds = array<i64: 128, 128>}, {transform_indices = @transform_2, window_bounds = array<i64: 1, 128>}, {transform_indices = @transform_3, window_bounds = array<i64: 8, 128>}]} {
    %c0 = arith.constant 0 : index
    %c0_0 = arith.constant 0 : index
    %0 = vector.load %arg3[%c0, %c0_0] : memref<8x128xf32, #tpu.memory_space<vmem>>, vector<8x128xf32>
    %c0_1 = arith.constant 0 : index
    %c0_2 = arith.constant 0 : index
    %1 = vector.load %arg4[%c0_1, %c0_2] : memref<128x128xf32, #tpu.memory_space<vmem>>, vector<128x128xf32>
    %cst = arith.constant dense<0.000000e+00> : vector<8x128xf32>
    %2 = tpu.matmul %0, %1, %cst {dimension_numbers = #tpu.dot_dimension_numbers<[1], [0], [0], [1], [0, 0, 1, 1], [], []>} : vector<8x128xf32>, vector<128x128xf32>, vector<8x128xf32> -> vector<8x128xf32>
    %c0_3 = arith.constant 0 : index
    %c0_4 = arith.constant 0 : index
    %3 = vector.load %arg5[%c0_3, %c0_4] : memref<1x128xf32, #tpu.memory_space<vmem>>, vector<1x128xf32>
    %4 = vector.broadcast %3 : vector<1x128xf32> to vector<8x128xf32>
    %5 = arith.addf %2, %4 : vector<8x128xf32>
    %cst_5 = arith.constant 0.000000e+00 : f32
    %6 = vector.broadcast %cst_5 : f32 to vector<8x128xf32>
    %7 = arith.maximumf %5, %6 : vector<8x128xf32>
    %c0_6 = arith.constant 0 : index
    %c0_7 = arith.constant 0 : index
    %8 = vector.load %arg6[%c0_6, %c0_7] : memref<8x128xf32, #tpu.memory_space<vmem>>, vector<8x128xf32>
    tpu.vector_store %arg6[%c0_6, %c0_7], %7 {strides = array<i32>} : memref<8x128xf32, #tpu.memory_space<vmem>>, vector<8x128xf32>,
    return
  }
  func.func @transform_0(%arg0: i32, %arg1: i32, %arg2: i32) -> (i32, i32) {
    %c0_i32 = arith.constant 0 : i32
    return %arg0, %arg2 : i32, i32
  }
  func.func @transform_1(%arg0: i32, %arg1: i32, %arg2: i32) -> (i32, i32) {
    %c0_i32 = arith.constant 0 : i32
    return %arg2, %arg1 : i32, i32
  }
  func.func @transform_2(%arg0: i32, %arg1: i32, %arg2: i32) -> (i32, i32) {
    %c0_i32 = arith.constant 0 : i32
    %c0_i32_0 = arith.constant 0 : i32
    return %c0_i32, %arg1 : i32, i32
  }
  func.func @transform_3(%arg0: i32, %arg1: i32, %arg2: i32) -> (i32, i32) {
    %c0_i32 = arith.constant 0 : i32
    return %arg0, %arg1 : i32, i32
  }
}

</mosaic_0001>

<llo_original>
// kernel: tpu_custom_call.1
$region0: #{tpu_custom_call.1}
  #allocation0 [shape = 'u32[]', space=smem, size = 0x4, offset = 0x4, fixed_abs, tag = 'smem constant byte address 0x4 - core index']
  #allocation1 [shape = 'u32[144,128]{1,0:T(1,128)}', space=vmem, size = 0x12000, scoped, tag = 'internal scratch']
  %s0 = inlined_call_operand.hbm [shape: f32[8,128], index: 0, kind: input, shape index: {}]
  %s1 = inlined_call_operand.hbm [shape: f32[128,128], index: 1, kind: input, shape index: {}]
  %s2 = inlined_call_operand.vmem [shape: f32[1,128], index: 2, kind: input, shape index: {}]
  %s3 = inlined_call_operand.hbm [shape: f32[8,128], index: 3, kind: output, shape index: {}]
  %s4 = sld [smem:[#allocation0]]
  $region30: #{tpu_custom_call.1} parent=0
    _
  %s6 = ssub.s32 1, %s4
  %s7 = scalar_select 0, %s6, %s4
  $region1: #{tpu_custom_call.1} parent=0
    #allocation2 [shape = 'u8[4096]{0}', space=vmem, size = 0x1000, scoped, tag = 'input window, operand 0, single buffered']
    #allocation3 [shape = 's32[1]{0}', space=sflag, size = 0x4, scoped, tag = 'scoped memory for tpu_custom_call.1']
    #allocation4 [shape = 's32[1]{0}', space=sflag, size = 0x4, scoped, tag = 'scoped memory for tpu_custom_call.1']
    #allocation5 [shape = 'u8[65536]{0}', space=vmem, size = 0x10000, scoped, tag = 'input window, operand 1, single buffered']
    #allocation6 [shape = 's32[1]{0}', space=sflag, size = 0x4, scoped, tag = 'scoped memory for tpu_custom_call.1']
    #allocation7 [shape = 'u8[4096]{0}', space=vmem, size = 0x1000, scoped, tag = 'output window, operand 0, single buffered']
    %8 = vsyncpa [#allocation3], 0
    %9 = vsyncpa [#allocation6], 0
    %10 = vsyncpa [#allocation4], 0
    // Predicated region
    $region2: #{tpu_custom_call.1} parent=1 // pred_check
      _
    $region3: #{tpu_custom_call.1} parent=1 // pred_check_branch
      %12 = sbr.rel (0) target = $region5
    $region4: #{tpu_custom_call.1} parent=1 // pred_region
      %s14 = ssub.s32 128, 128
      %15 = vsyncadd [#allocation3], %s14
      %s17 = sshll.u32 [#allocation2], 4
      %s18 = int_to_ptr.vmem [resolvable:$true] %s17
      %20 = dma.hbm_to_vmem [thread:$0]  %s0, 128, %s18, [#allocation3]
    $region5: #{tpu_custom_call.1} parent=1 // pred_fallthru
      _
    // Predicated region
    $region6: #{tpu_custom_call.1} parent=1 // pred_check
      _
    $region7: #{tpu_custom_call.1} parent=1 // pred_check_branch
      %22 = sbr.rel (0) target = $region9
    $region8: #{tpu_custom_call.1} parent=1 // pred_region
      %s24 = ssub.s32 2048, 2048
      %25 = vsyncadd [#allocation6], %s24
      %s26 = sshll.u32 [#allocation5], 4
      %s27 = int_to_ptr.vmem [resolvable:$true] %s26
      %32 = dma.hbm_to_vmem [thread:$0]  %s1, 2048, %s27, [#allocation6], 128, 128, 8
    $region9: #{tpu_custom_call.1} parent=1 // pred_fallthru
      _
    // Predicated region
    $region10: #{tpu_custom_call.1} parent=1 // pred_check
      _
    $region11: #{tpu_custom_call.1} parent=1 // pred_check_branch
      %34 = sbr.rel (0) target = $region13
    $region12: #{tpu_custom_call.1} parent=1 // pred_region
      _
    $region13: #{tpu_custom_call.1} parent=1 // pred_fallthru
      _
    // Predicated region
    $region14: #{tpu_custom_call.1} parent=1 // pred_check
      _
    $region15: #{tpu_custom_call.1} parent=1 // pred_check_branch
      %36 = sbr.rel (0) target = $region17
    $region16: #{tpu_custom_call.1} parent=1 // pred_region
      %37 = dma.done [#allocation3], 128
    $region17: #{tpu_custom_call.1} parent=1 // pred_fallthru
      _
    // Predicated region
    $region18: #{tpu_custom_call.1} parent=1 // pred_check
      _
    $region19: #{tpu_custom_call.1} parent=1 // pred_check_branch
      %39 = sbr.rel (0) target = $region21
    $region20: #{tpu_custom_call.1} parent=1 // pred_region
      %40 = dma.done [#allocation6], 2048
    $region21: #{tpu_custom_call.1} parent=1 // pred_fallthru
      _
    %v41 = vld [vmem:[#allocation2] sm:$0xff]
    %v42 = vld [vmem:[#allocation5] sm:$0xff]
    %v43 = vld [vmem:[#allocation5 + $0x8] sm:$0xff]
    %v44 = vld [vmem:[#allocation5 + $0x10] sm:$0xff]
    %v45 = vld [vmem:[#allocation5 + $0x18] sm:$0xff]
    %v46 = vld [vmem:[#allocation5 + $0x20] sm:$0xff]
    %v47 = vld [vmem:[#allocation5 + $0x28] sm:$0xff]
    %v48 = vld [vmem:[#allocation5 + $0x30] sm:$0xff]
    %v49 = vld [vmem:[#allocation5 + $0x38] sm:$0xff]
    %v50 = vld [vmem:[#allocation5 + $0x40] sm:$0xff]
    %v51 = vld [vmem:[#allocation5 + $0x48] sm:$0xff]
    %v52 = vld [vmem:[#allocation5 + $0x50] sm:$0xff]
    %v53 = vld [vmem:[#allocation5 + $0x58] sm:$0xff]
    %v54 = vld [vmem:[#allocation5 + $0x60] sm:$0xff]
    %v55 = vld [vmem:[#allocation5 + $0x68] sm:$0xff]
    %v56 = vld [vmem:[#allocation5 + $0x70] sm:$0xff]
    %v57 = vld [vmem:[#allocation5 + $0x78] sm:$0xff]
    %v58 = vld [vmem:[%s2] sm:$0x1]
    %v60 = vlaneseq
    %v61 = vshrl.u32 %v60, 7
    %v62 = vsub.s32 0, %v61
    %v63 = vrot.slane %v58, %v62
    %65 = vmatprep.subr.mxu0 0.0
    %66 = vmatpush1.msra.mxu0 %v57
    %67 = vmatprep.subr.mxu0 0.0
    %68 = vmatpush1.msra.mxu0 %v56
    %69 = vmatprep.subr.mxu0 0.0
    %70 = vmatpush1.msra.mxu0 %v55
    %71 = vmatprep.subr.mxu0 0.0
    %72 = vmatpush1.msra.mxu0 %v54
    %73 = vmatprep.subr.mxu0 0.0
    %74 = vmatpush1.msra.mxu0 %v53
    %75 = vmatprep.subr.mxu0 0.0
    %76 = vmatpush1.msra.mxu0 %v52
    %77 = vmatprep.subr.mxu0 0.0
    %78 = vmatpush1.msra.mxu0 %v51
    %79 = vmatprep.subr.mxu0 0.0
    %80 = vmatpush1.msra.mxu0 %v50
    %81 = vmatprep.subr.mxu0 0.0
    %82 = vmatpush1.msra.mxu0 %v49
    %83 = vmatprep.subr.mxu0 0.0
    %84 = vmatpush1.msra.mxu0 %v48
    %85 = vmatprep.subr.mxu0 0.0
    %86 = vmatpush1.msra.mxu0 %v47
    %87 = vmatprep.subr.mxu0 0.0
    %88 = vmatpush1.msra.mxu0 %v46
    %89 = vmatprep.subr.mxu0 0.0
    %90 = vmatpush1.msra.mxu0 %v45
    %91 = vmatprep.subr.mxu0 0.0
    %92 = vmatpush1.msra.mxu0 %v44
    %93 = vmatprep.subr.mxu0 0.0
    %94 = vmatpush1.msra.mxu0 %v43
    %95 = vmatprep.subr.mxu0 0.0
    %96 = vmatpush1.msra.mxu0 %v42
    %97 = vmatprep.subr.mxu0 0.0
    %98 = vmatpush2.msra.mxu0 0.0
    %99 = vmatprep.subr.mxu0 0.0
    %100 = vmatpush2.msra.mxu0 0.0
    %101 = vmatprep.subr.mxu0 0.0
    %102 = vmatpush2.msra.mxu0 0.0
    %103 = vmatprep.subr.mxu0 0.0
    %104 = vmatpush2.msra.mxu0 0.0
    %105 = vmatprep.subr.mxu0 0.0
    %106 = vmatpush2.msra.mxu0 0.0
    %107 = vmatprep.subr.mxu0 0.0
    %108 = vmatpush2.msra.mxu0 0.0
    %109 = vmatprep.subr.mxu0 0.0
    %110 = vmatpush2.msra.mxu0 0.0
    %111 = vmatprep.subr.mxu0 0.0
    %112 = vmatpush2.msra.mxu0 0.0
    %113 = vmatprep.subr.mxu0 0.0
    %114 = vmatpush2.msra.mxu0 0.0
    %115 = vmatprep.subr.mxu0 0.0
    %116 = vmatpush2.msra.mxu0 0.0
    %117 = vmatprep.subr.mxu0 0.0
    %118 = vmatpush2.msra.mxu0 0.0
    %119 = vmatprep.subr.mxu0 0.0
    %120 = vmatpush2.msra.mxu0 0.0
    %121 = vmatprep.subr.mxu0 0.0
    %122 = vmatpush2.msra.mxu0 0.0
    %123 = vmatprep.subr.mxu0 0.0
    %124 = vmatpush2.msra.mxu0 0.0
    %125 = vmatprep.subr.mxu0 0.0
    %126 = vmatpush2.msra.mxu0 0.0
    %127 = vmatprep.subr.mxu0 0.0
    %128 = vmatpush2.msra.mxu0 0.0
    %129 = vmatprep.mubr.f32.mxu0 0.0
    %130 = vmatmul.mubr.f32.gmra.mxu0 %v41
    %v131 = vpop.f32.mrf.mxu0
    %v132 = vadd.f32 %v63, %v131
    %v133 = vpop.f32.mrf.mxu0
    %134 = vdwg.mxu0
    %v135 = vmax.f32 %v132, 0.0
    %136 = vst [vmem:[#allocation7] sm:$0xff] %v135
    // Predicated region
    $region22: #{tpu_custom_call.1} parent=1 // pred_check
      _
    $region23: #{tpu_custom_call.1} parent=1 // pred_check_branch
      %138 = sbr.rel (0) target = $region25
    $region24: #{tpu_custom_call.1} parent=1 // pred_region
      %s140 = ssub.s32 128, 128
      %141 = vsyncadd [#allocation4], %s140
      %s143 = sshll.u32 [#allocation7], 4
      %s144 = int_to_ptr.vmem [resolvable:$true] %s143
      %146 = dma.vmem_to_hbm [thread:$0]  %s144, 128, %s3, [#allocation4]
    $region25: #{tpu_custom_call.1} parent=1 // pred_fallthru
      _
    // Predicated region
    $region26: #{tpu_custom_call.1} parent=1 // pred_check
      _
    $region27: #{tpu_custom_call.1} parent=1 // pred_check_branch
      %148 = sbr.rel (0) target = $region29
    $region28: #{tpu_custom_call.1} parent=1 // pred_region
      %149 = dma.done [#allocation4], 128
    $region29: #{tpu_custom_call.1} parent=1 // pred_fallthru
      _
    %150 = vsyncpa [#allocation3], 1
    %151 = vsyncpa [#allocation6], 1
    %152 = vsyncpa [#allocation4], 1

</llo_original>
